<compile_context>
chip_gen: v6e
topology: v6e:2x2x1
jax: 0.10.0
libtpu: 0.0.40
codegen_flags: <defaults>
</compile_context>

<pallas_src>
import functools

import jax
import jax.numpy as jnp
from jax.experimental import pallas as pl
from jax.experimental.pallas import tpu as pltpu


def _round_up(x, m):
    return (x + m - 1) // m * m


# ---------------------------------------------------------------------------
# Kernel body
# ---------------------------------------------------------------------------
def decoder_kernel(z_ref, w1_ref, b1_ref, w2_ref, b2_ref, w3_ref, b3_ref,
                   out_ref, *, approx_sigmoid):
    mm = w1_ref.dtype  # MXU input dtype (bf16 by default); accumulation is f32.

    # layer 1: relu(z @ W1 + b1)
    h1 = jnp.dot(z_ref[...].astype(mm), w1_ref[...],
                 preferred_element_type=jnp.float32) + b1_ref[...]
    h1 = jnp.maximum(h1, 0.0)

    # layer 2: relu(h1 @ W2 + b2)
    h2 = jnp.dot(h1.astype(mm), w2_ref[...],
                 preferred_element_type=jnp.float32) + b2_ref[...]
    h2 = jnp.maximum(h2, 0.0)

    # output layer: sigmoid(h2 @ W3 + b3)  (W3 / b3 are lane-padded to 128x)
    logits = jnp.dot(h2.astype(mm), w3_ref[...],
                     preferred_element_type=jnp.float32) + b3_ref[...]
    if approx_sigmoid:
        # exp and the reciprocal both run on the EUP slot -> no VALU divide
        # over the largest elementwise tensor (v5e win, neutral+ elsewhere).
        x = pl.reciprocal(1.0 + jnp.exp(-logits), approx=True)
    else:
        x = jax.nn.sigmoid(logits)
    out_ref[...] = x.astype(out_ref.dtype)


# ---------------------------------------------------------------------------
# Single-buffered resident weights (feature-probed so the script always runs)
# ---------------------------------------------------------------------------
_SINGLE_BUFFER_MODE = None  # lazily resolved to pl.Buffered(1) or False


def _probe_copy_kernel(x_ref, o_ref):
    o_ref[...] = x_ref[...]


def _weight_pipeline_mode():
    """pl.Buffered(1) if this JAX supports single-buffered operands on a
    top-level pallas_call (constant index_map => no double buffering needed,
    halves weight VMEM), otherwise None (default double-buffered pipeline)."""
    global _SINGLE_BUFFER_MODE
    if _SINGLE_BUFFER_MODE is None:
        try:
            mode = pl.Buffered(1)
            probe = pl.pallas_call(
                _probe_copy_kernel,
                out_shape=jax.ShapeDtypeStruct((8, 128), jnp.float32),
                grid=(1,),
                in_specs=[pl.BlockSpec((8, 128), lambda i: (0, 0),
                                       pipeline_mode=mode)],
                out_specs=pl.BlockSpec((8, 128), lambda i: (0, 0)),
            )
            jax.block_until_ready(probe(jnp.zeros((8, 128), jnp.float32)))
            _SINGLE_BUFFER_MODE = mode
        except Exception:  # unsupported -> silently use the default pipeline
            _SINGLE_BUFFER_MODE = False
    return _SINGLE_BUFFER_MODE or None


def _spec(shape, index_map, *, resident=False):
    mode = _weight_pipeline_mode() if resident else None
    if mode is None:
        return pl.BlockSpec(shape, index_map)
    return pl.BlockSpec(shape, index_map, pipeline_mode=mode)


# ---------------------------------------------------------------------------
# One-time parameter prep (hoisted out of the forward path)
# ---------------------------------------------------------------------------
def prepare_params(params, *, matmul_dtype=jnp.bfloat16, out_block=128):
    """Pads the output layer to a lane-dense multiple of `out_block` and casts
    weights to the MXU input dtype once, at init.  Biases stay f32 so all
    elementwise math is f32 (v5e has no bf16 VPU/EUP)."""
    w1, b1 = params["w1"], params["b1"]
    w2, b2 = params["w2"], params["b2"]
    w3, b3 = params["w3"], params["b3"]
    out_dim = w3.shape[1]
    out_pad = _round_up(out_dim, out_block)
    if out_pad != out_dim:
        w3 = jnp.pad(w3, ((0, 0), (0, out_pad - out_dim)))
        b3 = jnp.pad(b3, ((0, 0), (0, out_pad - out_dim)))
    return dict(
        w1=w1.astype(matmul_dtype), b1=b1.astype(jnp.float32),
        w2=w2.astype(matmul_dtype), b2=b2.astype(jnp.float32),
        w3=w3.astype(matmul_dtype), b3=b3.astype(jnp.float32),
        out_dim=out_dim,
    )


# ---------------------------------------------------------------------------
# Forward wrapper
# ---------------------------------------------------------------------------
def decoder_forward(z, prepped, *, batch_tile=512, out_tile=None,
                    approx_sigmoid=True, out_dtype=jnp.float32, trim=True,
                    vmem_limit_bytes=32 << 20):
    """z: (B, z_dim) f32.  `prepped`: output of prepare_params()."""
    w1, b1 = prepped["w1"], prepped["b1"]
    w2, b2 = prepped["w2"], prepped["b2"]
    w3, b3 = prepped["w3"], prepped["b3"]
    out_dim = prepped["out_dim"]

    B, z_dim = z.shape
    h0 = w1.shape[1]
    h1d = w2.shape[1]
    out_pad = w3.shape[1]
    mm_dtype = w1.dtype

    # ---- batch tiling: big tiles amortize per-step overhead; 16-sublane
    # rounding for bf16 MXU packing (8 for f32); pad B up to a multiple of TB.
    sub = 16 if mm_dtype == jnp.bfloat16 else 8
    TB = _round_up(min(batch_tile, _round_up(B, sub)), sub)
    B_pad = _round_up(B, TB)
    if B_pad != B:
        z = jnp.pad(z, ((0, B_pad - B), (0, 0)))

    # ---- optional output-feature tiling (second *parallel* grid axis).
    # Keeps a huge nn_out weight from needing to be fully VMEM-resident (v7x:
    # 64 MiB/TC) and gives both v7x TensorCores work when the batch grid is
    # tiny.  h1/h2 are recomputed per N-step, so only enable in those regimes.
    TN = out_pad if out_tile is None else min(_round_up(out_tile, 128), out_pad)
    assert out_pad % TN == 0, "out_tile must evenly divide the padded output dim"
    nj = out_pad // TN
    grid = (B_pad // TB, nj)
    # TODO(synk): very large hidden dims (>=2048 f32 on v7x) would also need W2
    # tiled with a K-accumulation grid axis; not needed at these sizes.

    # ---- advisory cost estimate for XLA scheduling around the custom call.
    mm_bytes = jnp.dtype(mm_dtype).itemsize
    cost = pl.CostEstimate(
        flops=2 * B_pad * (nj * (z_dim * h0 + h0 * h1d) + h1d * out_pad),
        transcendentals=2 * B_pad * out_pad,
        bytes_accessed=(B_pad * z_dim * 4
                        + (z_dim * h0 + h0 * h1d + h1d * out_pad) * mm_bytes
                        + (h0 + h1d + out_pad) * 4
                        + B_pad * out_pad * jnp.dtype(out_dtype).itemsize),
    )

    out_padded = pl.pallas_call(
        functools.partial(decoder_kernel, approx_sigmoid=approx_sigmoid),
        out_shape=jax.ShapeDtypeStruct((B_pad, out_pad), out_dtype),
        grid=grid,
        in_specs=[
            _spec((TB, z_dim), lambda i, j: (i, 0)),                    # z (batch-blocked)
            _spec((z_dim, h0), lambda i, j: (0, 0), resident=True),     # W1
            _spec((1, h0),     lambda i, j: (0, 0), resident=True),     # b1
            _spec((h0, h1d),   lambda i, j: (0, 0), resident=True),     # W2
            _spec((1, h1d),    lambda i, j: (0, 0), resident=True),     # b2
            _spec((h1d, TN),   lambda i, j: (0, j), resident=(nj == 1)),  # W3
            _spec((1, TN),     lambda i, j: (0, j), resident=(nj == 1)),  # b3
        ],
        out_specs=pl.BlockSpec((TB, TN), lambda i, j: (i, j)),
        compiler_params=pltpu.CompilerParams(
            dimension_semantics=("parallel", "parallel"),
            vmem_limit_bytes=vmem_limit_bytes,
        ),
        cost_estimate=cost,
    )(z, w1, b1, w2, b2, w3, b3)

    if not trim:                       # consumer accepts the lane-padded slab
        return out_padded
    return out_padded[:B, :out_dim]    # no-op when nothing was padded


# ---------------------------------------------------------------------------
# Synthetic params + pure-JAX reference
# ---------------------------------------------------------------------------
def init_params(key, z_dim, hidden_dims, output_dim):
    """Deterministic synthetic params. Weights are (in_dim, out_dim) (PyTorch W^T)."""
    ks = jax.random.split(key, 6)

    def lin(kw, kb, din, dout):
        bound = 1.0 / jnp.sqrt(din)
        w = jax.random.uniform(kw, (din, dout), jnp.float32, -bound, bound)
        b = jax.random.uniform(kb, (1, dout), jnp.float32, -bound, bound)
        return w, b

    w1, b1 = lin(ks[0], ks[1], z_dim, hidden_dims[0])
    w2, b2 = lin(ks[2], ks[3], hidden_dims[0], hidden_dims[1])
    w3, b3 = lin(ks[4], ks[5], hidden_dims[1], output_dim)
    return dict(w1=w1, b1=b1, w2=w2, b2=b2, w3=w3, b3=b3)


def decoder_ref(z, params):
    """Pure-JAX reference of the PyTorch Decoder.forward."""
    h1 = jax.nn.relu(z @ params["w1"] + params["b1"])
    h2 = jax.nn.relu(h1 @ params["w2"] + params["b2"])
    return jax.nn.sigmoid(h2 @ params["w3"] + params["b3"])


if __name__ == "__main__":
    # Small shapes consistent with a VAE decoder (MNIST-style reconstruction).
    B, z_dim = 8, 16
    hidden_dims = (32, 64)
    output_dim = 784

    key = jax.random.PRNGKey(0)
    kz, kp = jax.random.split(key, 2)
    z = jax.random.normal(kz, (B, z_dim), jnp.float32)
    params = init_params(kp, z_dim, hidden_dims, output_dim)

    x_ref = decoder_ref(z, params)

    # Fast default path: bf16 MXU inputs (f32 accumulation), approx-EUP sigmoid.
    prep_fast = prepare_params(params)              # one-time prep (pad + cast)
    x_fast = decoder_forward(z, prep_fast)
    jax.block_until_ready(x_fast)
    assert x_fast.shape == (B, output_dim)
    assert jnp.allclose(x_fast, x_ref, atol=3e-2, rtol=3e-2)

    # Exact path: f32 MXU, exact sigmoid, N-tiled output layer (exercises the
    # second parallel grid axis used for v7x small-batch / large-W3 cases).
    prep_f32 = prepare_params(params, matmul_dtype=jnp.float32)
    x_exact = decoder_forward(z, prep_f32, approx_sigmoid=False, out_tile=128)
    jax.block_until_ready(x_exact)
    assert x_exact.shape == (B, output_dim)
    assert jnp.allclose(x_exact, x_ref, atol=1e-5, rtol=1e-5)

    print("KERNEL_OK")
</pallas_src>

<mosaic_0001>
module attributes {stable_mosaic.version = 11 : i64} {
  func.func @_probe_copy_kernel(%arg0: i32, %arg1: memref<8x128xf32, #tpu.memory_space<vmem>>, %arg2: memref<8x128xf32, #tpu.memory_space<vmem>>) attributes {dimension_semantics = [#tpu.dimension_semantics<arbitrary>], iteration_bounds = array<i64: 1>, scalar_prefetch = 0 : i64, scratch_operands = 0 : i64, tpu.core_type = #tpu.core_type<tc>, window_params = [{pipeline_mode = #tpu.pipeline_mode<synchronous>, transform_indices = @transform_0, window_bounds = array<i64: 8, 128>}, {pipeline_mode = #tpu.pipeline_mode<synchronous>, transform_indices = @transform_1, window_bounds = array<i64: 8, 128>}]} {
    %c0 = arith.constant 0 : index
    %c0_0 = arith.constant 0 : index
    %0 = vector.load %arg1[%c0, %c0_0] : memref<8x128xf32, #tpu.memory_space<vmem>>, vector<8x128xf32>
    %c0_1 = arith.constant 0 : index
    %c0_2 = arith.constant 0 : index
    %1 = vector.load %arg2[%c0_1, %c0_2] : memref<8x128xf32, #tpu.memory_space<vmem>>, vector<8x128xf32>
    tpu.vector_store %arg2[%c0_1, %c0_2], %0 {strides = array<i32>} : memref<8x128xf32, #tpu.memory_space<vmem>>, vector<8x128xf32>,
    return
  }
  func.func @transform_0(%arg0: i32) -> (i32, i32) {
    %c0_i32 = arith.constant 0 : i32
    %c0_i32_0 = arith.constant 0 : i32
    %c0_i32_1 = arith.constant 0 : i32
    return %c0_i32, %c0_i32_0 : i32, i32
  }
  func.func @transform_1(%arg0: i32) -> (i32, i32) {
    %c0_i32 = arith.constant 0 : i32
    %c0_i32_0 = arith.constant 0 : i32
    %c0_i32_1 = arith.constant 0 : i32
    return %c0_i32, %c0_i32_0 : i32, i32
  }
}

module attributes {stable_mosaic.version = 11 : i64} {
  func.func @decoder_kernel(%arg0: i32, %arg1: i32, %arg2: memref<16x16xf32, #tpu.memory_space<vmem>>, %arg3: memref<16x32xbf16, #tpu.memory_space<vmem>>, %arg4: memref<1x32xf32, #tpu.memory_space<vmem>>, %arg5: memref<32x64xbf16, #tpu.memory_space<vmem>>, %arg6: memref<1x64xf32, #tpu.memory_space<vmem>>, %arg7: memref<64x896xbf16, #tpu.memory_space<vmem>>, %arg8: memref<1x896xf32, #tpu.memory_space<vmem>>, %arg9: memref<16x896xf32, #tpu.memory_space<vmem>>) attributes {dimension_semantics = [#tpu.dimension_semantics<parallel>, #tpu.dimension_semantics<parallel>], iteration_bounds = array<i64: 1, 1>, scalar_prefetch = 0 : i64, scratch_operands = 0 : i64, tpu.core_type = #tpu.core_type<tc>, window_params = [{transform_indices = @transform_0, window_bounds = array<i64: 16, 16>}, {pipeline_mode = #tpu.pipeline_mode<synchronous>, transform_indices = @transform_1, window_bounds = array<i64: 16, 32>}, {pipeline_mode = #tpu.pipeline_mode<synchronous>, transform_indices = @transform_2, window_bounds = array<i64: 1, 32>}, {pipeline_mode = #tpu.pipeline_mode<synchronous>, transform_indices = @transform_3, window_bounds = array<i64: 32, 64>}, {pipeline_mode = #tpu.pipeline_mode<synchronous>, transform_indices = @transform_4, window_bounds = array<i64: 1, 64>}, {transform_indices = @transform_5, window_bounds = array<i64: 64, 896>}, {transform_indices = @transform_6, window_bounds = array<i64: 1, 896>}, {transform_indices = @transform_7, window_bounds = array<i64: 16, 896>}]} {
    %c0 = arith.constant 0 : index
    %c0_0 = arith.constant 0 : index
    %0 = vector.load %arg2[%c0, %c0_0] : memref<16x16xf32, #tpu.memory_space<vmem>>, vector<16x16xf32>
    %1 = arith.truncf %0 : vector<16x16xf32> to vector<16x16xbf16>
    %c0_1 = arith.constant 0 : index
    %c0_2 = arith.constant 0 : index
    %2 = vector.load %arg3[%c0_1, %c0_2] : memref<16x32xbf16, #tpu.memory_space<vmem>>, vector<16x32xbf16>
    %cst = arith.constant dense<0.000000e+00> : vector<16x32xf32>
    %3 = tpu.matmul %1, %2, %cst {dimension_numbers = #tpu.dot_dimension_numbers<[1], [0], [0], [1], [0, 0, 1, 1], [], []>} : vector<16x16xbf16>, vector<16x32xbf16>, vector<16x32xf32> -> vector<16x32xf32>
    %c0_3 = arith.constant 0 : index
    %c0_4 = arith.constant 0 : index
    %4 = vector.load %arg4[%c0_3, %c0_4] : memref<1x32xf32, #tpu.memory_space<vmem>>, vector<1x32xf32>
    %5 = vector.broadcast %4 : vector<1x32xf32> to vector<16x32xf32>
    %6 = arith.addf %3, %5 : vector<16x32xf32>
    %cst_5 = arith.constant 0.000000e+00 : f32
    %7 = vector.broadcast %cst_5 : f32 to vector<16x32xf32>
    %8 = arith.maximumf %6, %7 : vector<16x32xf32>
    %9 = arith.truncf %8 : vector<16x32xf32> to vector<16x32xbf16>
    %c0_6 = arith.constant 0 : index
    %c0_7 = arith.constant 0 : index
    %10 = vector.load %arg5[%c0_6, %c0_7] : memref<32x64xbf16, #tpu.memory_space<vmem>>, vector<32x64xbf16>
    %cst_8 = arith.constant dense<0.000000e+00> : vector<16x64xf32>
    %11 = tpu.matmul %9, %10, %cst_8 {dimension_numbers = #tpu.dot_dimension_numbers<[1], [0], [0], [1], [0, 0, 1, 1], [], []>} : vector<16x32xbf16>, vector<32x64xbf16>, vector<16x64xf32> -> vector<16x64xf32>
    %c0_9 = arith.constant 0 : index
    %c0_10 = arith.constant 0 : index
    %12 = vector.load %arg6[%c0_9, %c0_10] : memref<1x64xf32, #tpu.memory_space<vmem>>, vector<1x64xf32>
    %13 = vector.broadcast %12 : vector<1x64xf32> to vector<16x64xf32>
    %14 = arith.addf %11, %13 : vector<16x64xf32>
    %cst_11 = arith.constant 0.000000e+00 : f32
    %15 = vector.broadcast %cst_11 : f32 to vector<16x64xf32>
    %16 = arith.maximumf %14, %15 : vector<16x64xf32>
    %17 = arith.truncf %16 : vector<16x64xf32> to vector<16x64xbf16>
    %c0_12 = arith.constant 0 : index
    %c0_13 = arith.constant 0 : index
    %18 = vector.load %arg7[%c0_12, %c0_13] : memref<64x896xbf16, #tpu.memory_space<vmem>>, vector<64x896xbf16>
    %cst_14 = arith.constant dense<0.000000e+00> : vector<16x896xf32>
    %19 = tpu.matmul %17, %18, %cst_14 {dimension_numbers = #tpu.dot_dimension_numbers<[1], [0], [0], [1], [0, 0, 1, 1], [], []>} : vector<16x64xbf16>, vector<64x896xbf16>, vector<16x896xf32> -> vector<16x896xf32>
    %c0_15 = arith.constant 0 : index
    %c0_16 = arith.constant 0 : index
    %20 = vector.load %arg8[%c0_15, %c0_16] : memref<1x896xf32, #tpu.memory_space<vmem>>, vector<1x896xf32>
    %21 = vector.broadcast %20 : vector<1x896xf32> to vector<16x896xf32>
    %22 = arith.addf %19, %21 : vector<16x896xf32>
    %cst_17 = arith.constant 0.000000e+00 : f32
    %23 = vector.broadcast %cst_17 : f32 to vector<16x896xf32>
    %24 = arith.subf %23, %22 : vector<16x896xf32>
    %25 = math.exp %24 : vector<16x896xf32>
    %cst_18 = arith.constant 1.000000e+00 : f32
    %26 = vector.broadcast %cst_18 : f32 to vector<16x896xf32>
    %27 = arith.addf %26, %25 : vector<16x896xf32>
    %28 = tpu.reciprocal %27 {approx = true} : vector<16x896xf32> -> vector<16x896xf32>
    %c0_19 = arith.constant 0 : index
    %c0_20 = arith.constant 0 : index
    %29 = vector.load %arg9[%c0_19, %c0_20] : memref<16x896xf32, #tpu.memory_space<vmem>>, vector<16x896xf32>
    tpu.vector_store %arg9[%c0_19, %c0_20], %28 {strides = array<i32>} : memref<16x896xf32, #tpu.memory_space<vmem>>, vector<16x896xf32>,
    return
  }
  func.func @transform_0(%arg0: i32, %arg1: i32) -> (i32, i32) {
    %c0_i32 = arith.constant 0 : i32
    %c0_i32_0 = arith.constant 0 : i32
    return %arg0, %c0_i32 : i32, i32
  }
  func.func @transform_1(%arg0: i32, %arg1: i32) -> (i32, i32) {
    %c0_i32 = arith.constant 0 : i32
    %c0_i32_0 = arith.constant 0 : i32
    %c0_i32_1 = arith.constant 0 : i32
    return %c0_i32, %c0_i32_0 : i32, i32
  }
  func.func @transform_2(%arg0: i32, %arg1: i32) -> (i32, i32) {
    %c0_i32 = arith.constant 0 : i32
    %c0_i32_0 = arith.constant 0 : i32
    %c0_i32_1 = arith.constant 0 : i32
    return %c0_i32, %c0_i32_0 : i32, i32
  }
  func.func @transform_3(%arg0: i32, %arg1: i32) -> (i32, i32) {
    %c0_i32 = arith.constant 0 : i32
    %c0_i32_0 = arith.constant 0 : i32
    %c0_i32_1 = arith.constant 0 : i32
    return %c0_i32, %c0_i32_0 : i32, i32
  }
  func.func @transform_4(%arg0: i32, %arg1: i32) -> (i32, i32) {
    %c0_i32 = arith.constant 0 : i32
    %c0_i32_0 = arith.constant 0 : i32
    %c0_i32_1 = arith.constant 0 : i32
    return %c0_i32, %c0_i32_0 : i32, i32
  }
  func.func @transform_5(%arg0: i32, %arg1: i32) -> (i32, i32) {
    %c0_i32 = arith.constant 0 : i32
    %c0_i32_0 = arith.constant 0 : i32
    return %c0_i32, %arg1 : i32, i32
  }
  func.func @transform_6(%arg0: i32, %arg1: i32) -> (i32, i32) {
    %c0_i32 = arith.constant 0 : i32
    %c0_i32_0 = arith.constant 0 : i32
    return %c0_i32, %arg1 : i32, i32
  }
  func.func @transform_7(%arg0: i32, %arg1: i32) -> (i32, i32) {
    %c0_i32 = arith.constant 0 : i32
    return %arg0, %arg1 : i32, i32
  }
}

</mosaic_0001>

<llo_original>
// kernel: tpu_custom_call.1
$region0: #{tpu_custom_call.1}
  #allocation0 [shape = 'u32[]', space=smem, size = 0x4, offset = 0x4, fixed_abs, tag = 'smem constant byte address 0x4 - core index']
  #allocation1 [shape = 'u32[144,128]{1,0:T(1,128)}', space=vmem, size = 0x12000, scoped, tag = 'internal scratch']
  %s0 = inlined_call_operand.hbm [shape: f32[8,128], index: 0, kind: input, shape index: {}]
  %s1 = inlined_call_operand.hbm [shape: f32[8,128], index: 1, kind: output, shape index: {}]
  %s2 = sld [smem:[#allocation0]]
  $region18: #{tpu_custom_call.1} parent=0
    _
  %s4 = ssub.s32 1, %s2
  %s5 = scalar_select 0, %s4, %s2
  $region1: #{tpu_custom_call.1} parent=0
    #allocation2 [shape = 'u8[4096]{0}', space=vmem, size = 0x1000, scoped, tag = 'input window, operand 0, single buffered']
    #allocation3 [shape = 's32[1]{0}', space=sflag, size = 0x4, scoped, tag = 'scoped memory for tpu_custom_call.1']
    #allocation4 [shape = 's32[1]{0}', space=sflag, size = 0x4, scoped, tag = 'scoped memory for tpu_custom_call.1']
    #allocation5 [shape = 'u8[4096]{0}', space=vmem, size = 0x1000, scoped, tag = 'output window, operand 0, single buffered']
    %6 = vsyncpa [#allocation3], 0
    %7 = vsyncpa [#allocation4], 0
    // Predicated region
    $region2: #{tpu_custom_call.1} parent=1 // pred_check
      _
    $region3: #{tpu_custom_call.1} parent=1 // pred_check_branch
      %9 = sbr.rel (0) target = $region5
    $region4: #{tpu_custom_call.1} parent=1 // pred_region
      %s11 = ssub.s32 128, 128
      %12 = vsyncadd [#allocation3], %s11
      %s14 = sshll.u32 [#allocation2], 4
      %s15 = int_to_ptr.vmem [resolvable:$true] %s14
      %17 = dma.hbm_to_vmem [thread:$0]  %s0, 128, %s15, [#allocation3]
    $region5: #{tpu_custom_call.1} parent=1 // pred_fallthru
      _
    // Predicated region
    $region6: #{tpu_custom_call.1} parent=1 // pred_check
      _
    $region7: #{tpu_custom_call.1} parent=1 // pred_check_branch
      %19 = sbr.rel (0) target = $region9
    $region8: #{tpu_custom_call.1} parent=1 // pred_region
      %20 = dma.done [#allocation3], 128
    $region9: #{tpu_custom_call.1} parent=1 // pred_fallthru
      _
    %v21 = vld [vmem:[#allocation2] sm:$0xff]
    %22 = vst [vmem:[#allocation5] sm:$0xff] %v21
    // Predicated region
    $region10: #{tpu_custom_call.1} parent=1 // pred_check
      _
    $region11: #{tpu_custom_call.1} parent=1 // pred_check_branch
      %24 = sbr.rel (0) target = $region13
    $region12: #{tpu_custom_call.1} parent=1 // pred_region
      %s26 = ssub.s32 128, 128
      %27 = vsyncadd [#allocation4], %s26
      %s29 = sshll.u32 [#allocation5], 4
      %s30 = int_to_ptr.vmem [resolvable:$true] %s29
      %32 = dma.vmem_to_hbm [thread:$0]  %s30, 128, %s1, [#allocation4]
    $region13: #{tpu_custom_call.1} parent=1 // pred_fallthru
      _
    // Predicated region
    $region14: #{tpu_custom_call.1} parent=1 // pred_check
      _
    $region15: #{tpu_custom_call.1} parent=1 // pred_check_branch
      %34 = sbr.rel (0) target = $region17
    $region16: #{tpu_custom_call.1} parent=1 // pred_region
      %35 = dma.done [#allocation4], 128
    $region17: #{tpu_custom_call.1} parent=1 // pred_fallthru
      _
    %36 = vsyncpa [#allocation3], 1
    %37 = vsyncpa [#allocation4], 1

// kernel: tpu_custom_call.1
$region0: #{tpu_custom_call.1}
  #allocation0 [shape = 'u32[]', space=smem, size = 0x4, offset = 0x4, fixed_abs, tag = 'smem constant byte address 0x4 - core index']
  #allocation1 [shape = 'u32[144,128]{1,0:T(1,128)}', space=vmem, size = 0x12000, scoped, tag = 'internal scratch']
  %s0 = inlined_call_operand.hbm [shape: f32[16,16], index: 0, kind: input, shape index: {}]
  %s1 = inlined_call_operand.hbm [shape: bf16[16,32], index: 1, kind: input, shape index: {}]
  %s2 = inlined_call_operand.vmem [shape: f32[1,32], index: 2, kind: input, shape index: {}]
  %s3 = inlined_call_operand.hbm [shape: bf16[32,64], index: 3, kind: input, shape index: {}]
  %s4 = inlined_call_operand.vmem [shape: f32[1,64], index: 4, kind: input, shape index: {}]
  %s5 = inlined_call_operand.hbm [shape: bf16[64,896], index: 5, kind: input, shape index: {}]
  %s6 = inlined_call_operand.vmem [shape: f32[1,896], index: 6, kind: input, shape index: {}]
  %s7 = inlined_call_operand.hbm [shape: f32[16,896], index: 7, kind: output, shape index: {}]
  %s8 = sld [smem:[#allocation0]]
  $region54: #{tpu_custom_call.1} parent=0
    _
  %s10 = ssub.s32 1, %s8
  %s11 = scalar_select 0, %s10, %s8
  $region1: #{tpu_custom_call.1} parent=0
    #allocation2 [shape = 'u8[8192]{0}', space=vmem, size = 0x2000, scoped, tag = 'input window, operand 0, single buffered']
    #allocation3 [shape = 's32[1]{0}', space=sflag, size = 0x4, scoped, tag = 'scoped memory for tpu_custom_call.1']
    #allocation4 [shape = 's32[1]{0}', space=sflag, size = 0x4, scoped, tag = 'scoped memory for tpu_custom_call.1']
    #allocation5 [shape = 'u8[4096]{0}', space=vmem, size = 0x1000, scoped, tag = 'input window, operand 1, single buffered']
    #allocation6 [shape = 's32[1]{0}', space=sflag, size = 0x4, scoped, tag = 'scoped memory for tpu_custom_call.1']
    #allocation7 [shape = 'u8[8192]{0}', space=vmem, size = 0x2000, scoped, tag = 'input window, operand 3, single buffered']
    #allocation8 [shape = 'u8[114688]{0}', space=vmem, size = 0x1c000, scoped, tag = 'input window, operand 5, single buffered']
    #allocation9 [shape = 's32[1]{0}', space=sflag, size = 0x4, scoped, tag = 'scoped memory for tpu_custom_call.1']
    #allocation10 [shape = 'u8[57344]{0}', space=vmem, size = 0xe000, scoped, tag = 'output window, operand 0, single buffered']
    %12 = vsyncpa [#allocation3], 0
    %13 = vsyncpa [#allocation6], 0
    %14 = vsyncpa [#allocation9], 0
    %15 = vsyncpa [#allocation4], 0
    // Predicated region
    $region2: #{tpu_custom_call.1} parent=1 // pred_check
      _
    $region3: #{tpu_custom_call.1} parent=1 // pred_check_branch
      %17 = sbr.rel (0) target = $region5
    $region4: #{tpu_custom_call.1} parent=1 // pred_region
      %s19 = ssub.s32 256, 256
      %20 = vsyncadd [#allocation3], %s19
      %s21 = sshll.u32 [#allocation2], 4
      %s22 = int_to_ptr.vmem [resolvable:$true] %s21
      %27 = dma.hbm_to_vmem [thread:$0]  %s0, 256, %s22, [#allocation3], 128, 128, 8
    $region5: #{tpu_custom_call.1} parent=1 // pred_fallthru
      _
    // Predicated region
    $region6: #{tpu_custom_call.1} parent=1 // pred_check
      _
    $region7: #{tpu_custom_call.1} parent=1 // pred_check_branch
      %29 = sbr.rel (0) target = $region9
    $region8: #{tpu_custom_call.1} parent=1 // pred_region
      %s31 = ssub.s32 128, 128
      %32 = vsyncadd [#allocation6], %s31
      %s33 = sshll.u32 [#allocation5], 4
      %s34 = int_to_ptr.vmem [resolvable:$true] %s33
      %39 = dma.hbm_to_vmem [thread:$0]  %s1, 128, %s34, [#allocation6], 64, 64, 4
    $region9: #{tpu_custom_call.1} parent=1 // pred_fallthru
      _
    // Predicated region
    $region10: #{tpu_custom_call.1} parent=1 // pred_check
      _
    $region11: #{tpu_custom_call.1} parent=1 // pred_check_branch
      %41 = sbr.rel (0) target = $region13
    $region12: #{tpu_custom_call.1} parent=1 // pred_region
      _
    $region13: #{tpu_custom_call.1} parent=1 // pred_fallthru
      _
    // Predicated region
    $region14: #{tpu_custom_call.1} parent=1 // pred_check
      _
    $region15: #{tpu_custom_call.1} parent=1 // pred_check_branch
      %43 = sbr.rel (0) target = $region17
    $region16: #{tpu_custom_call.1} parent=1 // pred_region
      %s45 = ssub.s32 256, 256
      %46 = vsyncadd [#allocation6], %s45
      %s47 = sshll.u32 [#allocation7], 4
      %s48 = int_to_ptr.vmem [resolvable:$true] %s47
      %53 = dma.hbm_to_vmem [thread:$0]  %s3, 256, %s48, [#allocation6], 64, 64, 4
    $region17: #{tpu_custom_call.1} parent=1 // pred_fallthru
      _
    // Predicated region
    $region18: #{tpu_custom_call.1} parent=1 // pred_check
      _
    $region19: #{tpu_custom_call.1} parent=1 // pred_check_branch
      %55 = sbr.rel (0) target = $region21
    $region20: #{tpu_custom_call.1} parent=1 // pred_region
      _
    $region21: #{tpu_custom_call.1} parent=1 // pred_fallthru
      _
    // Predicated region
    $region22: #{tpu_custom_call.1} parent=1 // pred_check
      _
    $region23: #{tpu_custom_call.1} parent=1 // pred_check_branch
      %57 = sbr.rel (0) target = $region25
    $region24: #{tpu_custom_call.1} parent=1 // pred_region
      %s59 = ssub.s32 3584, 3584
      %60 = vsyncadd [#allocation9], %s59
      %s61 = sshll.u32 [#allocation8], 4
      %s62 = int_to_ptr.vmem [resolvable:$true] %s61
      %67 = dma.hbm_to_vmem [thread:$0]  %s5, 3584, %s62, [#allocation9], 448, 448, 28
    $region25: #{tpu_custom_call.1} parent=1 // pred_fallthru
      _
    // Predicated region
    $region26: #{tpu_custom_call.1} parent=1 // pred_check
      _
    $region27: #{tpu_custom_call.1} parent=1 // pred_check_branch
      %69 = sbr.rel (0) target = $region29
    $region28: #{tpu_custom_call.1} parent=1 // pred_region
      _
    $region29: #{tpu_custom_call.1} parent=1 // pred_fallthru
      _
    // Predicated region
    $region30: #{tpu_custom_call.1} parent=1 // pred_check
      _
    $region31: #{tpu_custom_call.1} parent=1 // pred_check_branch
      %71 = sbr.rel (0) target = $region33
    $region32: #{tpu_custom_call.1} parent=1 // pred_region
      %72 = dma.done [#allocation3], 256
    $region33: #{tpu_custom_call.1} parent=1 // pred_fallthru
      _
    // Predicated region
    $region34: #{tpu_custom_call.1} parent=1 // pred_check
      _
    $region35: #{tpu_custom_call.1} parent=1 // pred_check_branch
      %74 = sbr.rel (0) target = $region37
    $region36: #{tpu_custom_call.1} parent=1 // pred_region
      %75 = dma.done [#allocation6], 128
    $region37: #{tpu_custom_call.1} parent=1 // pred_fallthru
      _
    // Predicated region
    $region38: #{tpu_custom_call.1} parent=1 // pred_check
      _
    $region39: #{tpu_custom_call.1} parent=1 // pred_check_branch
      %77 = sbr.rel (0) target = $region41
    $region40: #{tpu_custom_call.1} parent=1 // pred_region
      %78 = dma.done [#allocation6], 256
    $region41: #{tpu_custom_call.1} parent=1 // pred_fallthru
      _
    // Predicated region
    $region42: #{tpu_custom_call.1} parent=1 // pred_check
      _
    $region43: #{tpu_custom_call.1} parent=1 // pred_check_branch
      %80 = sbr.rel (0) target = $region45
    $region44: #{tpu_custom_call.1} parent=1 // pred_region
      %81 = dma.done [#allocation9], 3584
    $region45: #{tpu_custom_call.1} parent=1 // pred_fallthru
      _
    %v83 = vld [vmem:[#allocation2] sm:$0xff]
    %v84 = vld [vmem:[#allocation2 + $0x8] sm:$0xff]
    %v85 = vpack.c.bf16 %v84, %v83
    %v86 = vld [vmem:[#allocation5] sm:$0xf]
    %v87 = vld [vmem:[#allocation5 + $0x4] sm:$0xf]
    %v88 = vld [vmem:[%s2] sm:$0x1]
    %v90 = vlaneseq
    %v91 = vshrl.u32 %v90, 7
    %v92 = vsub.s32 0, %v91
    %v93 = vrot.slane %v88, %v92
    %v97 = vunpack.c.l.b16 %v86
    %v98 = vunpack.c.l.b16 %v87
    %v99 = vpack.c.b16 %v98, %v97
    %vm101 = vcmask 130048
    %v103 = vsel %vm101, %v85, 0
    %105 = vmatprep.subr.bf16.mxu0 0
    %106 = vmatpush1.bf16.msra.mxu0 0
    %107 = vmatprep.subr.bf16.mxu0 0
    %108 = vmatpush1.bf16.msra.mxu0 0
    %109 = vmatprep.subr.bf16.mxu0 0
    %110 = vmatpush1.bf16.msra.mxu0 0
    %111 = vmatprep.subr.bf16.mxu0 0
    %112 = vmatpush1.bf16.msra.mxu0 0
    %113 = vmatprep.subr.bf16.mxu0 0
    %114 = vmatpush1.bf16.msra.mxu0 0
    %115 = vmatprep.subr.bf16.mxu0 0
    %116 = vmatpush1.bf16.msra.mxu0 0
    %117 = vmatprep.subr.bf16.mxu0 0
    %118 = vmatpush1.bf16.msra.mxu0 0
    %119 = vmatprep.subr.bf16.mxu0 0
    %120 = vmatpush1.bf16.msra.mxu0 %v99
    %121 = vmatprep.subr.bf16.mxu0 0
    %122 = vmatpush2.bf16.msra.mxu0 0
    %123 = vmatprep.subr.bf16.mxu0 0
    %124 = vmatpush2.bf16.msra.mxu0 0
    %125 = vmatprep.subr.bf16.mxu0 0
    %126 = vmatpush2.bf16.msra.mxu0 0
    %127 = vmatprep.subr.bf16.mxu0 0
    %128 = vmatpush2.bf16.msra.mxu0 0
    %129 = vmatprep.subr.bf16.mxu0 0
    %130 = vmatpush2.bf16.msra.mxu0 0
    %131 = vmatprep.subr.bf16.mxu0 0
    %132 = vmatpush2.bf16.msra.mxu0 0
    %133 = vmatprep.subr.bf16.mxu0 0
    %134 = vmatpush2.bf16.msra.mxu0 0
    %135 = vmatprep.subr.bf16.mxu0 0
    %136 = vmatpush2.bf16.msra.mxu0 0
    %137 = vmatprep.mubr.bf16.mxu0 0
    %138 = vmatmul.mubr.bf16.gmra.mxu0 %v103
    %v139 = vpop.f32.mrf.mxu0
    %v140 = vadd.f32 %v93, %v139
    %v141 = vpop.f32.mrf.mxu0
    %v142 = vpop.f32.mrf.mxu0
    %v143 = vadd.f32 %v93, %v142
    %v144 = vpop.f32.mrf.mxu0
    %145 = vdwg.mxu0
    %v146 = vmax.f32 %v140, 0.0
    %v147 = vmax.f32 %v143, 0.0
    %v148 = vpack.c.bf16 %v147, %v146
    %v149 = vld [vmem:[#allocation7] sm:$0xf]
    %v150 = vld [vmem:[#allocation7 + $0x4] sm:$0xf]
    %v151 = vld [vmem:[#allocation7 + $0x8] sm:$0xf]
    %v152 = vld [vmem:[#allocation7 + $0xc] sm:$0xf]
    %v153 = vld [vmem:[%s4] sm:$0x1]
    %v155 = vlaneseq
    %v156 = vshrl.u32 %v155, 7
    %v157 = vsub.s32 0, %v156
    %v158 = vrot.slane %v153, %v157
    %v164 = vunpack.c.l.b16 %v149
    %v165 = vunpack.c.l.b16 %v150
    %v166 = vunpack.c.l.b16 %v151
    %v167 = vunpack.c.l.b16 %v152
    %v168 = vpack.c.b16 %v165, %v164
    %v169 = vpack.c.b16 %v167, %v166
    %vm172 = vcmask 261120
    %v174 = vsel %vm172, %v148, 0
    %176 = vmatprep.subr.bf16.mxu0 0
    %177 = vmatpush1.bf16.msra.mxu0 0
    %178 = vmatprep.subr.bf16.mxu0 0
    %179 = vmatpush1.bf16.msra.mxu0 0
    %180 = vmatprep.subr.bf16.mxu0 0
    %181 = vmatpush1.bf16.msra.mxu0 0
    %182 = vmatprep.subr.bf16.mxu0 0
    %183 = vmatpush1.bf16.msra.mxu0 0
    %184 = vmatprep.subr.bf16.mxu0 0
    %185 = vmatpush1.bf16.msra.mxu0 0
    %186 = vmatprep.subr.bf16.mxu0 0
    %187 = vmatpush1.bf16.msra.mxu0 0
    %188 = vmatprep.subr.bf16.mxu0 0
    %189 = vmatpush1.bf16.msra.mxu0 %v169
    %190 = vmatprep.subr.bf16.mxu0 0
    %191 = vmatpush1.bf16.msra.mxu0 %v168
    %192 = vmatprep.subr.bf16.mxu0 0
    %193 = vmatpush2.bf16.msra.mxu0 0
    %194 = vmatprep.subr.bf16.mxu0 0
    %195 = vmatpush2.bf16.msra.mxu0 0
    %196 = vmatprep.subr.bf16.mxu0 0
    %197 = vmatpush2.bf16.msra.mxu0 0
    %198 = vmatprep.subr.bf16.mxu0 0
    %199 = vmatpush2.bf16.msra.mxu0 0
    %200 = vmatprep.subr.bf16.mxu0 0
    %201 = vmatpush2.bf16.msra.mxu0 0
    %202 = vmatprep.subr.bf16.mxu0 0
    %203 = vmatpush2.bf16.msra.mxu0 0
    %204 = vmatprep.subr.bf16.mxu0 0
    %205 = vmatpush2.bf16.msra.mxu0 0
    %206 = vmatprep.subr.bf16.mxu0 0
    %207 = vmatpush2.bf16.msra.mxu0 0
    %208 = vmatprep.mubr.bf16.mxu0 0
    %209 = vmatmul.mubr.bf16.gmra.mxu0 %v174
    %v210 = vpop.f32.mrf.mxu0
    %v211 = vadd.f32 %v158, %v210
    %v212 = vpop.f32.mrf.mxu0
    %v213 = vpop.f32.mrf.mxu0
    %v214 = vadd.f32 %v158, %v213
    %v215 = vpop.f32.mrf.mxu0
    %216 = vdwg.mxu0
    %v217 = vmax.f32 %v211, 0.0
    %v218 = vmax.f32 %v214, 0.0
    %v219 = vpack.c.bf16 %v218, %v217
    %v220 = vld [vmem:[#allocation8] sm:$0xff]
    %v221 = vld [vmem:[#allocation8 + $0x8] sm:$0xff]
    %v222 = vld [vmem:[#allocation8 + $0x10] sm:$0xff]
    %v223 = vld [vmem:[#allocation8 + $0x18] sm:$0xf]
    %v224 = vld [vmem:[#allocation8 + $0x1c] sm:$0xff]
    %v225 = vld [vmem:[#allocation8 + $0x24] sm:$0xff]
    %v226 = vld [vmem:[#allocation8 + $0x2c] sm:$0xff]
    %v227 = vld [vmem:[#allocation8 + $0x34] sm:$0xf]
    %v228 = vld [vmem:[#allocation8 + $0x38] sm:$0xff]
    %v229 = vld [vmem:[#allocation8 + $0x40] sm:$0xff]
    %v230 = vld [vmem:[#allocation8 + $0x48] sm:$0xff]
    %v231 = vld [vmem:[#allocation8 + $0x50] sm:$0xf]
    %v232 = vld [vmem:[#allocation8 + $0x54] sm:$0xff]
    %v233 = vld [vmem:[#allocation8 + $0x5c] sm:$0xff]
    %v234 = vld [vmem:[#allocation8 + $0x64] sm:$0xff]
    %v235 = vld [vmem:[#allocation8 + $0x6c] sm:$0xf]
    %v236 = vld [vmem:[#allocation8 + $0x70] sm:$0xff]
    %v237 = vld [vmem:[#allocation8 + $0x78] sm:$0xff]
    %v238 = vld [vmem:[#allocation8 + $0x80] sm:$0xff]
    %v239 = vld [vmem:[#allocation8 + $0x88] sm:$0xf]
    %v240 = vld [vmem:[#allocation8 + $0x8c] sm:$0xff]
    %v241 = vld [vmem:[#allocation8 + $0x94] sm:$0xff]
    %v242 = vld [vmem:[#allocation8 + $0x9c] sm:$0xff]
    %v243 = vld [vmem:[#allocation8 + $0xa4] sm:$0xf]
    %v244 = vld [vmem:[#allocation8 + $0xa8] sm:$0xff]
    %v245 = vld [vmem:[#allocation8 + $0xb0] sm:$0xff]
    %v246 = vld [vmem:[#allocation8 + $0xb8] sm:$0xff]
    %v247 = vld [vmem:[#allocation8 + $0xc0] sm:$0xf]
    %v248 = vld [vmem:[#allocation8 + $0xc4] sm:$0xff]
    %v249 = vld [vmem:[#allocation8 + $0xcc] sm:$0xff]
    %v250 = vld [vmem:[#allocation8 + $0xd4] sm:$0xff]
    %v251 = vld [vmem:[#allocation8 + $0xdc] sm:$0xf]
    %v252 = vld [vmem:[%s6] sm:$0xff]
    %v254 = vlaneseq
    %v255 = vshrl.u32 %v254, 7
    %v256 = vsub.s32 0, %v255
    %v257 = vrot.slane %v252, %v256
    %v258 = vlaneseq
    %v259 = vshrl.u32 %v258, 7
    %v260 = vsub.s32 1, %v259
    %v261 = vrot.slane %v252, %v260
    %v262 = vlaneseq
    %v263 = vshrl.u32 %v262, 7
    %v264 = vsub.s32 2, %v263
    %v265 = vrot.slane %v252, %v264
    %v266 = vlaneseq
    %v267 = vshrl.u32 %v266, 7
    %v268 = vsub.s32 3, %v267
    %v269 = vrot.slane %v252, %v268
    %v270 = vlaneseq
    %v271 = vshrl.u32 %v270, 7
    %v272 = vsub.s32 4, %v271
    %v273 = vrot.slane %v252, %v272
    %v274 = vlaneseq
    %v275 = vshrl.u32 %v274, 7
    %v276 = vsub.s32 5, %v275
    %v277 = vrot.slane %v252, %v276
    %v278 = vlaneseq
    %v279 = vshrl.u32 %v278, 7
    %v280 = vsub.s32 6, %v279
    %v281 = vrot.slane %v252, %v280
    %v321 = vunpack.c.l.b16 %v220
    %v322 = vunpack.c.h.b16 %v220
    %v323 = vunpack.c.l.b16 %v221
    %v324 = vunpack.c.h.b16 %v221
    %v325 = vunpack.c.l.b16 %v222
    %v326 = vunpack.c.h.b16 %v222
    %v327 = vunpack.c.l.b16 %v223
    %v328 = vunpack.c.l.b16 %v224
    %v329 = vunpack.c.h.b16 %v224
    %v330 = vunpack.c.l.b16 %v225
    %v331 = vunpack.c.h.b16 %v225
    %v332 = vunpack.c.l.b16 %v226
    %v333 = vunpack.c.h.b16 %v226
    %v334 = vunpack.c.l.b16 %v227
    %v335 = vunpack.c.l.b16 %v228
    %v336 = vunpack.c.h.b16 %v228
    %v337 = vunpack.c.l.b16 %v229
    %v338 = vunpack.c.h.b16 %v229
    %v339 = vunpack.c.l.b16 %v230
    %v340 = vunpack.c.h.b16 %v230
    %v341 = vunpack.c.l.b16 %v231
    %v342 = vunpack.c.l.b16 %v232
    %v343 = vunpack.c.h.b16 %v232
    %v344 = vunpack.c.l.b16 %v233
    %v345 = vunpack.c.h.b16 %v233
    %v346 = vunpack.c.l.b16 %v234
    %v347 = vunpack.c.h.b16 %v234
    %v348 = vunpack.c.l.b16 %v235
    %v349 = vunpack.c.l.b16 %v236
    %v350 = vunpack.c.h.b16 %v236
    %v351 = vunpack.c.l.b16 %v237
    %v352 = vunpack.c.h.b16 %v237
    %v353 = vunpack.c.l.b16 %v238
    %v354 = vunpack.c.h.b16 %v238
    %v355 = vunpack.c.l.b16 %v239
    %v356 = vunpack.c.l.b16 %v240
    %v357 = vunpack.c.h.b16 %v240
    %v358 = vunpack.c.l.b16 %v241
    %v359 = vunpack.c.h.b16 %v241
    %v360 = vunpack.c.l.b16 %v242
    %v361 = vunpack.c.h.b16 %v242
    %v362 = vunpack.c.l.b16 %v243
    %v363 = vunpack.c.l.b16 %v244
    %v364 = vunpack.c.h.b16 %v244
    %v365 = vunpack.c.l.b16 %v245
    %v366 = vunpack.c.h.b16 %v245
    %v367 = vunpack.c.l.b16 %v246
    %v368 = vunpack.c.h.b16 %v246
    %v369 = vunpack.c.l.b16 %v247
    %v370 = vunpack.c.l.b16 %v248
    %v371 = vunpack.c.h.b16 %v248
    %v372 = vunpack.c.l.b16 %v249
    %v373 = vunpack.c.h.b16 %v249
    %v374 = vunpack.c.l.b16 %v250
    %v375 = vunpack.c.h.b16 %v250
    %v376 = vunpack.c.l.b16 %v251
    %v377 = vpack.c.b16 %v328, %v321
    %v378 = vpack.c.b16 %v329, %v322
    %v379 = vpack.c.b16 %v330, %v323
    %v380 = vpack.c.b16 %v331, %v324
    %v381 = vpack.c.b16 %v332, %v325
    %v382 = vpack.c.b16 %v333, %v326
    %v383 = vpack.c.b16 %v334, %v327
    %v384 = vpack.c.b16 %v342, %v335
    %v385 = vpack.c.b16 %v343, %v336
    %v386 = vpack.c.b16 %v344, %v337
    %v387 = vpack.c.b16 %v345, %v338
    %v388 = vpack.c.b16 %v346, %v339
    %v389 = vpack.c.b16 %v347, %v340
    %v390 = vpack.c.b16 %v348, %v341
    %v391 = vpack.c.b16 %v356, %v349
    %v392 = vpack.c.b16 %v357, %v350
    %v393 = vpack.c.b16 %v358, %v351
    %v394 = vpack.c.b16 %v359, %v352
    %v395 = vpack.c.b16 %v360, %v353
    %v396 = vpack.c.b16 %v361, %v354
    %v397 = vpack.c.b16 %v362, %v355
    %v398 = vpack.c.b16 %v370, %v363
    %v399 = vpack.c.b16 %v371, %v364
    %v400 = vpack.c.b16 %v372, %v365
    %v401 = vpack.c.b16 %v373, %v366
    %v402 = vpack.c.b16 %v374, %v367
    %v403 = vpack.c.b16 %v375, %v368
    %v404 = vpack.c.b16 %v376, %v369
    %vm433 = vcmask 523264
    %v435 = vsel %vm433, %v219, 0
    %437 = vmatprep.subr.bf16.mxu0 0
    %438 = vmatpush1.bf16.msra.mxu0 0
    %439 = vmatprep.subr.bf16.mxu0 0
    %440 = vmatpush1.bf16.msra.mxu0 0
    %441 = vmatprep.subr.bf16.mxu0 0
    %442 = vmatpush1.bf16.msra.mxu0 0
    %443 = vmatprep.subr.bf16.mxu0 0
    %444 = vmatpush1.bf16.msra.mxu0 0
    %445 = vmatprep.subr.bf16.mxu0 %v399
    %446 = vmatpush1.bf16.msra.mxu0 %v398
    %447 = vmatprep.subr.bf16.mxu0 %v392
    %448 = vmatpush1.bf16.msra.mxu0 %v391
    %449 = vmatprep.subr.bf16.mxu0 %v385
    %450 = vmatpush1.bf16.msra.mxu0 %v384
    %451 = vmatprep.subr.bf16.mxu0 %v378
    %452 = vmatpush1.bf16.msra.mxu0 %v377
    %453 = vmatprep.subr.bf16.mxu0 0
    %454 = vmatpush2.bf16.msra.mxu0 0
    %455 = vmatprep.subr.bf16.mxu0 0
    %456 = vmatpush2.bf16.msra.mxu0 0
    %457 = vmatprep.subr.bf16.mxu0 0
    %458 = vmatpush2.bf16.msra.mxu0 0
    %459 = vmatprep.subr.bf16.mxu0 0
    %460 = vmatpush2.bf16.msra.mxu0 0
    %461 = vmatprep.subr.bf16.mxu0 0
    %462 = vmatpush2.bf16.msra.mxu0 0
    %463 = vmatprep.subr.bf16.mxu0 0
    %464 = vmatpush2.bf16.msra.mxu0 0
    %465 = vmatprep.subr.bf16.mxu0 0
    %466 = vmatpush2.bf16.msra.mxu0 0
    %467 = vmatprep.subr.bf16.mxu0 0
    %468 = vmatpush2.bf16.msra.mxu0 0
    %469 = vmatprep.mubr.bf16.mxu0 0
    %470 = vmatmul.mubr.bf16.gmra.mxu0 %v435
    %v471 = vpop.f32.mrf.mxu0
    %v472 = vadd.f32 %v257, %v471
    %v473 = vpop.f32.mrf.mxu0
    %v474 = vadd.f32 %v261, %v473
    %v475 = vpop.f32.mrf.mxu0
    %v476 = vadd.f32 %v257, %v475
    %v477 = vpop.f32.mrf.mxu0
    %v478 = vadd.f32 %v261, %v477
    %479 = vdwg.mxu0
    %480 = vmatprep.subr.bf16.mxu0 0
    %481 = vmatpush1.bf16.msra.mxu0 0
    %482 = vmatprep.subr.bf16.mxu0 0
    %483 = vmatpush1.bf16.msra.mxu0 0
    %484 = vmatprep.subr.bf16.mxu0 0
    %485 = vmatpush1.bf16.msra.mxu0 0
    %486 = vmatprep.subr.bf16.mxu0 0
    %487 = vmatpush1.bf16.msra.mxu0 0
    %488 = vmatprep.subr.bf16.mxu0 %v401
    %489 = vmatpush1.bf16.msra.mxu0 %v400
    %490 = vmatprep.subr.bf16.mxu0 %v394
    %491 = vmatpush1.bf16.msra.mxu0 %v393
    %492 = vmatprep.subr.bf16.mxu0 %v387
    %493 = vmatpush1.bf16.msra.mxu0 %v386
    %494 = vmatprep.subr.bf16.mxu0 %v380
    %495 = vmatpush1.bf16.msra.mxu0 %v379
    %496 = vmatprep.subr.bf16.mxu0 0
    %497 = vmatpush2.bf16.msra.mxu0 0
    %498 = vmatprep.subr.bf16.mxu0 0
    %499 = vmatpush2.bf16.msra.mxu0 0
    %500 = vmatprep.subr.bf16.mxu0 0
    %501 = vmatpush2.bf16.msra.mxu0 0
    %502 = vmatprep.subr.bf16.mxu0 0
    %503 = vmatpush2.bf16.msra.mxu0 0
    %504 = vmatprep.subr.bf16.mxu0 0
    %505 = vmatpush2.bf16.msra.mxu0 0
    %506 = vmatprep.subr.bf16.mxu0 0
    %507 = vmatpush2.bf16.msra.mxu0 0
    %508 = vmatprep.subr.bf16.mxu0 0
    %509 = vmatpush2.bf16.msra.mxu0 0
    %510 = vmatprep.subr.bf16.mxu0 0
    %511 = vmatpush2.bf16.msra.mxu0 0
    %512 = vmatprep.mubr.bf16.mxu0 0
    %513 = vmatmul.mubr.bf16.gmra.mxu0 %v435
    %v514 = vpop.f32.mrf.mxu0
    %v515 = vadd.f32 %v265, %v514
    %v516 = vpop.f32.mrf.mxu0
    %v517 = vadd.f32 %v269, %v516
    %v518 = vpop.f32.mrf.mxu0
    %v519 = vadd.f32 %v265, %v518
    %v520 = vpop.f32.mrf.mxu0
    %v521 = vadd.f32 %v269, %v520
    %522 = vdwg.mxu0
    %523 = vmatprep.subr.bf16.mxu0 0
    %524 = vmatpush1.bf16.msra.mxu0 0
    %525 = vmatprep.subr.bf16.mxu0 0
    %526 = vmatpush1.bf16.msra.mxu0 0
    %527 = vmatprep.subr.bf16.mxu0 0
    %528 = vmatpush1.bf16.msra.mxu0 0
    %529 = vmatprep.subr.bf16.mxu0 0
    %530 = vmatpush1.bf16.msra.mxu0 0
    %531 = vmatprep.subr.bf16.mxu0 %v403
    %532 = vmatpush1.bf16.msra.mxu0 %v402
    %533 = vmatprep.subr.bf16.mxu0 %v396
    %534 = vmatpush1.bf16.msra.mxu0 %v395
    %535 = vmatprep.subr.bf16.mxu0 %v389
    %536 = vmatpush1.bf16.msra.mxu0 %v388
    %537 = vmatprep.subr.bf16.mxu0 %v382
    %538 = vmatpush1.bf16.msra.mxu0 %v381
    %539 = vmatprep.subr.bf16.mxu0 0
    %540 = vmatpush2.bf16.msra.mxu0 0
    %541 = vmatprep.subr.bf16.mxu0 0
    %542 = vmatpush2.bf16.msra.mxu0 0
    %543 = vmatprep.subr.bf16.mxu0 0
    %544 = vmatpush2.bf16.msra.mxu0 0
    %545 = vmatprep.subr.bf16.mxu0 0
    %546 = vmatpush2.bf16.msra.mxu0 0
    %547 = vmatprep.subr.bf16.mxu0 0
    %548 = vmatpush2.bf16.msra.mxu0 0
    %549 = vmatprep.subr.bf16.mxu0 0
    %550 = vmatpush2.bf16.msra.mxu0 0
    %551 = vmatprep.subr.bf16.mxu0 0
    %552 = vmatpush2.bf16.msra.mxu0 0
    %553 = vmatprep.subr.bf16.mxu0 0
    %554 = vmatpush2.bf16.msra.mxu0 0
    %555 = vmatprep.mubr.bf16.mxu0 0
    %556 = vmatmul.mubr.bf16.gmra.mxu0 %v435
    %v557 = vpop.f32.mrf.mxu0
    %v558 = vadd.f32 %v273, %v557
    %v559 = vpop.f32.mrf.mxu0
    %v560 = vadd.f32 %v277, %v559
    %v561 = vpop.f32.mrf.mxu0
    %v562 = vadd.f32 %v273, %v561
    %v563 = vpop.f32.mrf.mxu0
    %v564 = vadd.f32 %v277, %v563
    %565 = vdwg.mxu0
    %566 = vmatprep.subr.bf16.mxu0 0
    %567 = vmatpush1.bf16.msra.mxu0 0
    %568 = vmatprep.subr.bf16.mxu0 0
    %569 = vmatpush1.bf16.msra.mxu0 0
    %570 = vmatprep.subr.bf16.mxu0 0
    %571 = vmatpush1.bf16.msra.mxu0 0
    %572 = vmatprep.subr.bf16.mxu0 0
    %573 = vmatpush1.bf16.msra.mxu0 0
    %574 = vmatprep.subr.bf16.mxu0 0
    %575 = vmatpush1.bf16.msra.mxu0 %v404
    %576 = vmatprep.subr.bf16.mxu0 0
    %577 = vmatpush1.bf16.msra.mxu0 %v397
    %578 = vmatprep.subr.bf16.mxu0 0
    %579 = vmatpush1.bf16.msra.mxu0 %v390
    %580 = vmatprep.subr.bf16.mxu0 0
    %581 = vmatpush1.bf16.msra.mxu0 %v383
    %582 = vmatprep.subr.bf16.mxu0 0
    %583 = vmatpush2.bf16.msra.mxu0 0
    %584 = vmatprep.subr.bf16.mxu0 0
    %585 = vmatpush2.bf16.msra.mxu0 0
    %586 = vmatprep.subr.bf16.mxu0 0
    %587 = vmatpush2.bf16.msra.mxu0 0
    %588 = vmatprep.subr.bf16.mxu0 0
    %589 = vmatpush2.bf16.msra.mxu0 0
    %590 = vmatprep.subr.bf16.mxu0 0
    %591 = vmatpush2.bf16.msra.mxu0 0
    %592 = vmatprep.subr.bf16.mxu0 0
    %593 = vmatpush2.bf16.msra.mxu0 0
    %594 = vmatprep.subr.bf16.mxu0 0
    %595 = vmatpush2.bf16.msra.mxu0 0
    %596 = vmatprep.subr.bf16.mxu0 0
    %597 = vmatpush2.bf16.msra.mxu0 0
    %598 = vmatprep.mubr.bf16.mxu0 0
    %599 = vmatmul.mubr.bf16.gmra.mxu0 %v435
    %v600 = vpop.f32.mrf.mxu0
    %v601 = vadd.f32 %v281, %v600
    %v602 = vpop.f32.mrf.mxu0
    %v603 = vpop.f32.mrf.mxu0
    %v604 = vadd.f32 %v281, %v603
    %v605 = vpop.f32.mrf.mxu0
    %606 = vdwg.mxu0
    %v607 = vsub.f32 0.0, %v472
    %v608 = vsub.f32 0.0, %v474
    %v609 = vsub.f32 0.0, %v515
    %v610 = vsub.f32 0.0, %v517
    %v611 = vsub.f32 0.0, %v558
    %v612 = vsub.f32 0.0, %v560
    %v613 = vsub.f32 0.0, %v601
    %v614 = vsub.f32 0.0, %v476
    %v615 = vsub.f32 0.0, %v478
    %v616 = vsub.f32 0.0, %v519
    %v617 = vsub.f32 0.0, %v521
    %v618 = vsub.f32 0.0, %v562
    %v619 = vsub.f32 0.0, %v564
    %v620 = vsub.f32 0.0, %v604
    %v621 = vmul.f32 %v607, 1.442695
    %v622 = vpow.pop %v621
    %v623 = vmul.f32 %v608, 1.442695
    %v624 = vpow.pop %v623
    %v625 = vmul.f32 %v609, 1.442695
    %v626 = vpow.pop %v625
    %v627 = vmul.f32 %v610, 1.442695
    %v628 = vpow.pop %v627
    %v629 = vmul.f32 %v611, 1.442695
    %v630 = vpow.pop %v629
    %v631 = vmul.f32 %v612, 1.442695
    %v632 = vpow.pop %v631
    %v633 = vmul.f32 %v613, 1.442695
    %v634 = vpow.pop %v633
    %v635 = vmul.f32 %v614, 1.442695
    %v636 = vpow.pop %v635
    %v637 = vmul.f32 %v615, 1.442695
    %v638 = vpow.pop %v637
    %v639 = vmul.f32 %v616, 1.442695
    %v640 = vpow.pop %v639
    %v641 = vmul.f32 %v617, 1.442695
    %v642 = vpow.pop %v641
    %v643 = vmul.f32 %v618, 1.442695
    %v644 = vpow.pop %v643
    %v645 = vmul.f32 %v619, 1.442695
    %v646 = vpow.pop %v645
    %v647 = vmul.f32 %v620, 1.442695
    %v648 = vpow.pop %v647
    %v649 = vadd.f32 %v622, 1.0
    %v650 = vadd.f32 %v624, 1.0
    %v651 = vadd.f32 %v626, 1.0
    %v652 = vadd.f32 %v628, 1.0
    %v653 = vadd.f32 %v630, 1.0
    %v654 = vadd.f32 %v632, 1.0
    %v655 = vadd.f32 %v634, 1.0
    %v656 = vadd.f32 %v636, 1.0
    %v657 = vadd.f32 %v638, 1.0
    %v658 = vadd.f32 %v640, 1.0
    %v659 = vadd.f32 %v642, 1.0
    %v660 = vadd.f32 %v644, 1.0
    %v661 = vadd.f32 %v646, 1.0
    %v662 = vadd.f32 %v648, 1.0
    %v663 = vrcp.pop %v649
    %v664 = vrcp.pop %v650
    %v665 = vrcp.pop %v651
    %v666 = vrcp.pop %v652
    %v667 = vrcp.pop %v653
    %v668 = vrcp.pop %v654
    %v669 = vrcp.pop %v655
    %v670 = vrcp.pop %v656
    %v671 = vrcp.pop %v657
    %v672 = vrcp.pop %v658
    %v673 = vrcp.pop %v659
    %v674 = vrcp.pop %v660
    %v675 = vrcp.pop %v661
    %v676 = vrcp.pop %v662
    %677 = vst [vmem:[#allocation10] sm:$0xff] %v663
    %678 = vst [vmem:[#allocation10 + $0x8] sm:$0xff] %v664
    %679 = vst [vmem:[#allocation10 + $0x10] sm:$0xff] %v665
    %680 = vst [vmem:[#allocation10 + $0x18] sm:$0xff] %v666
    %681 = vst [vmem:[#allocation10 + $0x20] sm:$0xff] %v667
    %682 = vst [vmem:[#allocation10 + $0x28] sm:$0xff] %v668
    %683 = vst [vmem:[#allocation10 + $0x30] sm:$0xff] %v669
    %684 = vst [vmem:[#allocation10 + $0x38] sm:$0xff] %v670
    %685 = vst [vmem:[#allocation10 + $0x40] sm:$0xff] %v671
    %686 = vst [vmem:[#allocation10 + $0x48] sm:$0xff] %v672
    %687 = vst [vmem:[#allocation10 + $0x50] sm:$0xff] %v673
    %688 = vst [vmem:[#allocation10 + $0x58] sm:$0xff] %v674
    %689 = vst [vmem:[#allocation10 + $0x60] sm:$0xff] %v675
    %690 = vst [vmem:[#allocation10 + $0x68] sm:$0xff] %v676
    // Predicated region
    $region46: #{tpu_custom_call.1} parent=1 // pred_check
      _
    $region47: #{tpu_custom_call.1} parent=1 // pred_check_branch
      %692 = sbr.rel (0) target = $region49
    $region48: #{tpu_custom_call.1} parent=1 // pred_region
      %s694 = ssub.s32 1792, 1792
      %695 = vsyncadd [#allocation4], %s694
      %s696 = sshll.u32 [#allocation10], 4
      %s697 = int_to_ptr.vmem [resolvable:$true] %s696
      %702 = dma.vmem_to_hbm [thread:$0]  %s697, 1792, %s7, [#allocation4], 896, 896, 56
    $region49: #{tpu_custom_call.1} parent=1 // pred_fallthru
      _
    // Predicated region
    $region50: #{tpu_custom_call.1} parent=1 // pred_check
      _
    $region51: #{tpu_custom_call.1} parent=1 // pred_check_branch
      %704 = sbr.rel (0) target = $region53
    $region52: #{tpu_custom_call.1} parent=1 // pred_region
      %705 = dma.done [#allocation4], 1792
    $region53: #{tpu_custom_call.1} parent=1 // pred_fallthru
      _
    %706 = vsyncpa [#allocation3], 1
    %707 = vsyncpa [#allocation6], 1
    %708 = vsyncpa [#allocation9], 1
    %709 = vsyncpa [#allocation4], 1

</llo_original>
